<compile_context>
chip_gen: v7x
topology: tpu7x:2x2x1
jax: 0.10.0
libtpu: 0.0.40
codegen_flags: <defaults>
</compile_context>

<pallas_src>
import jax
import jax.numpy as jnp
from jax import lax
from jax.experimental import pallas as pl
from jax.experimental.pallas import tpu as pltpu


def _pair(v):
    return (v, v) if isinstance(v, int) else tuple(v)


def _round_up(x, m):
    return (x + m - 1) // m * m


# ---------------------------------------------------------------------------
# Pallas kernel: lane-dense GEMM + bias (activations streamed, weights resident)
# ---------------------------------------------------------------------------
def _gemm_bias_kernel(p_ref, w_ref, b_ref, o_ref):
    acc = jnp.dot(p_ref[...], w_ref[...], preferred_element_type=jnp.float32)
    o_ref[...] = (acc + b_ref[...]).astype(o_ref.dtype)


def _gemm_bias(p, w, b, *, tm):
    m, k = p.shape
    n = w.shape[1]
    grid = (m // tm,)
    return pl.pallas_call(
        _gemm_bias_kernel,
        out_shape=jax.ShapeDtypeStruct((m, n), jnp.float32),
        grid_spec=pltpu.PrefetchScalarGridSpec(
            num_scalar_prefetch=0,
            grid=grid,
            in_specs=[
                pl.BlockSpec((tm, k), lambda i: (i, 0)),   # activations: streamed
                pl.BlockSpec((k, n), lambda i: (0, 0)),    # fused weights: resident
                pl.BlockSpec((1, n), lambda i: (0, 0)),    # fused bias: resident
            ],
            out_specs=pl.BlockSpec((tm, n), lambda i: (i, 0)),
        ),
        compiler_params=pltpu.CompilerParams(
            dimension_semantics=("parallel",),   # shards across TCs on v7x
        ),
    )(p, w, b)


# ---------------------------------------------------------------------------
# Wrapper-side layout plumbing (zero-insertion, im2col, weight fusion)
# ---------------------------------------------------------------------------
def _conv_transpose_weight_matrix(w):
    # w: [Cin, Cout, KH, KW] (PyTorch ConvTranspose2d layout).
    # Equivalent stride-1 conv uses the spatially flipped kernel; flatten K as
    # (ci, kh, kw) to match the im2col flattening below.
    cin, cout, kh, kw = w.shape
    wrev = w[:, :, ::-1, ::-1]
    return jnp.transpose(wrev, (0, 2, 3, 1)).reshape(cin * kh * kw, cout)


def _upsample_and_pad(v, stride, padding, output_padding, dilation, ksize):
    # v: [B, C, H, W].  Zero-insert (stride-1) between pixels + edge pad so a
    # stride-1 conv with the flipped kernel reproduces ConvTranspose2d.
    (sh, sw), (ph, pw) = stride, padding
    (oph, opw), (dh, dw) = output_padding, dilation
    kh, kw = ksize
    cfg = [
        (0, 0, 0),
        (0, 0, 0),
        (dh * (kh - 1) - ph, dh * (kh - 1) - ph + oph, sh - 1),
        (dw * (kw - 1) - pw, dw * (kw - 1) - pw + opw, sw - 1),
    ]
    return lax.pad(v, jnp.zeros((), v.dtype), cfg)


def _im2col(u, ksize, dilation, oh, ow):
    # u: [B, C, Hp, Wp] -> [B*oh*ow, C*KH*KW]; K flattened as (c, kh, kw).
    b, c, _, _ = u.shape
    kh, kw = ksize
    dh, dw = dilation
    taps = []
    for r in range(kh):
        for s in range(kw):
            taps.append(u[:, :, r * dh:r * dh + oh, s * dw:s * dw + ow])
    p = jnp.stack(taps, axis=-1)              # [B, C, oh, ow, KH*KW]
    p = jnp.transpose(p, (0, 2, 3, 1, 4))     # [B, oh, ow, C, KH*KW]
    return p.reshape(b * oh * ow, c * kh * kw)


def complex_conv_transpose2d(inp, wr, br, wi, bi, *, stride=1, padding=0,
                             output_padding=0, dilation=1):
    """Forward of ComplexConvTranspose2d (groups=1, zero padding mode).

    inp: [B, Cin, H, W] (last dim packs real | imag halves, W even).
    wr, wi: [Cin, Cout, KH, KW] (PyTorch ConvTranspose2d weight layout).
    br, bi: [Cout].
    Returns [B, Cout, OH, 2*OW].
    """
    stride, padding = _pair(stride), _pair(padding)
    output_padding, dilation = _pair(output_padding), _pair(dilation)
    b, cin, h, w = inp.shape
    cin_w, cout, kh, kw = wr.shape
    assert cin_w == cin and w % 2 == 0
    wh = w // 2

    # apply_complex split along the last (width) axis.
    x = inp[..., :wh]
    y = inp[..., wh:]

    oh = (h - 1) * stride[0] - 2 * padding[0] + dilation[0] * (kh - 1) + output_padding[0] + 1
    ow = (wh - 1) * stride[1] - 2 * padding[1] + dilation[1] * (kw - 1) + output_padding[1] + 1

    # Stack real/imag halves along channels, then build the equivalent
    # stride-1 convolution input and its im2col patches.
    u = jnp.concatenate([x, y], axis=1)                      # [B, 2*Cin, H, Wh]
    u = _upsample_and_pad(u, stride, padding, output_padding, dilation, (kh, kw))
    p = _im2col(u, (kh, kw), dilation, oh, ow)               # [M, 2*Cin*KH*KW]

    # Fused complex weight/bias:  [Px, Py] @ [[Wr, Wi], [-Wi, Wr]] -> [real | imag]
    wm_r = _conv_transpose_weight_matrix(wr)
    wm_i = _conv_transpose_weight_matrix(wi)
    w_big = jnp.concatenate(
        [jnp.concatenate([wm_r, wm_i], axis=1),
         jnp.concatenate([-wm_i, wm_r], axis=1)], axis=0)    # [2*Cin*KH*KW, 2*Cout]
    b_big = jnp.concatenate([br - bi, br + bi])[None, :]     # [1, 2*Cout]

    # Lane-dense padding (multiples of 128 on the last axes) + row tiling.
    m, k = p.shape
    n = w_big.shape[1]
    k_pad = _round_up(k, 128)
    n_pad = _round_up(n, 128)
    tm = min(512, _round_up(m, 8))
    m_pad = _round_up(m, tm)

    p_pad = jnp.pad(p.astype(jnp.float32), ((0, m_pad - m), (0, k_pad - k)))
    w_pad = jnp.pad(w_big.astype(jnp.float32), ((0, k_pad - k), (0, n_pad - n)))
    b_pad = jnp.pad(b_big.astype(jnp.float32), ((0, 0), (0, n_pad - n)))

    out = _gemm_bias(p_pad, w_pad, b_pad, tm=tm)             # [M_pad, N_pad]

    out = out[:m, :n].reshape(b, oh, ow, 2, cout)
    out_r = jnp.transpose(out[..., 0, :], (0, 3, 1, 2))      # [B, Cout, OH, OW]
    out_i = jnp.transpose(out[..., 1, :], (0, 3, 1, 2))
    return jnp.concatenate([out_r, out_i], axis=-1).astype(inp.dtype)


# ---------------------------------------------------------------------------
# Demo + reference check
# ---------------------------------------------------------------------------
if __name__ == "__main__":
    key = jax.random.PRNGKey(0)
    k1, k2, k3, k4, k5 = jax.random.split(key, 5)

    B, Cin, H, W = 2, 4, 16, 16      # W packs real|imag halves (8 each)
    Cout, ksize = 4, 3
    stride, padding, output_padding, dilation = 2, 1, 1, 1

    inp = jax.random.normal(k1, (B, Cin, H, W), dtype=jnp.float32)
    wr = 0.1 * jax.random.normal(k2, (Cin, Cout, ksize, ksize), dtype=jnp.float32)
    wi = 0.1 * jax.random.normal(k3, (Cin, Cout, ksize, ksize), dtype=jnp.float32)
    br = 0.1 * jax.random.normal(k4, (Cout,), dtype=jnp.float32)
    bi = 0.1 * jax.random.normal(k5, (Cout,), dtype=jnp.float32)

    out = complex_conv_transpose2d(
        inp, wr, br, wi, bi, stride=stride, padding=padding,
        output_padding=output_padding, dilation=dilation)
    out = jax.block_until_ready(out)

    # Reference: each ConvTranspose2d branch via lax.conv_general_dilated
    # (lhs_dilation = stride), combined exactly like apply_complex.
    def ref_conv_tr(t, wgt, bias):
        _, _, KH, KW = wgt.shape
        wflip = jnp.transpose(wgt[:, :, ::-1, ::-1], (1, 0, 2, 3))
        ph = dilation * (KH - 1) - padding
        pw = dilation * (KW - 1) - padding
        r = lax.conv_general_dilated(
            t, wflip, window_strides=(1, 1),
            padding=((ph, ph + output_padding), (pw, pw + output_padding)),
            lhs_dilation=(stride, stride), rhs_dilation=(dilation, dilation),
            dimension_numbers=("NCHW", "OIHW", "NCHW"))
        return r + bias[None, :, None, None]

    xh, yh = inp[..., :W // 2], inp[..., W // 2:]
    ref = jnp.concatenate(
        [ref_conv_tr(xh, wr, br) - ref_conv_tr(yh, wi, bi),
         ref_conv_tr(yh, wr, br) + ref_conv_tr(xh, wi, bi)], axis=-1)

    assert out.shape == ref.shape, (out.shape, ref.shape)
    max_err = float(jnp.max(jnp.abs(out - ref)))
    assert jnp.allclose(out, ref, atol=1e-4, rtol=1e-4), f"max_err={max_err}"

    print("KERNEL_OK")
</pallas_src>

<mosaic_0001>
module attributes {stable_mosaic.version = 11 : i64} {
  func.func @_gemm_bias_kernel(%arg0: i32, %arg1: memref<512x128xf32, #tpu.memory_space<vmem>>, %arg2: memref<128x128xf32, #tpu.memory_space<vmem>>, %arg3: memref<1x128xf32, #tpu.memory_space<vmem>>, %arg4: memref<512x128xf32, #tpu.memory_space<vmem>>) attributes {dimension_semantics = [#tpu.dimension_semantics<parallel>], iteration_bounds = array<i64: 2>, scalar_prefetch = 0 : i64, scratch_operands = 0 : i64, tpu.core_type = #tpu.core_type<tc>, window_params = [{transform_indices = @transform_0, window_bounds = array<i64: 512, 128>}, {pipeline_mode = #tpu.pipeline_mode<synchronous>, transform_indices = @transform_1, window_bounds = array<i64: 128, 128>}, {pipeline_mode = #tpu.pipeline_mode<synchronous>, transform_indices = @transform_2, window_bounds = array<i64: 1, 128>}, {transform_indices = @transform_3, window_bounds = array<i64: 512, 128>}]} {
    %c0 = arith.constant 0 : index
    %c0_0 = arith.constant 0 : index
    %0 = vector.load %arg1[%c0, %c0_0] : memref<512x128xf32, #tpu.memory_space<vmem>>, vector<512x128xf32>
    %c0_1 = arith.constant 0 : index
    %c0_2 = arith.constant 0 : index
    %1 = vector.load %arg2[%c0_1, %c0_2] : memref<128x128xf32, #tpu.memory_space<vmem>>, vector<128x128xf32>
    %cst = arith.constant dense<0.000000e+00> : vector<512x128xf32>
    %2 = tpu.matmul %0, %1, %cst {dimension_numbers = #tpu.dot_dimension_numbers<[1], [0], [0], [1], [0, 0, 1, 1], [], []>} : vector<512x128xf32>, vector<128x128xf32>, vector<512x128xf32> -> vector<512x128xf32>
    %c0_3 = arith.constant 0 : index
    %c0_4 = arith.constant 0 : index
    %3 = vector.load %arg3[%c0_3, %c0_4] : memref<1x128xf32, #tpu.memory_space<vmem>>, vector<1x128xf32>
    %4 = vector.broadcast %3 : vector<1x128xf32> to vector<512x128xf32>
    %5 = arith.addf %2, %4 : vector<512x128xf32>
    %c0_5 = arith.constant 0 : index
    %c0_6 = arith.constant 0 : index
    %6 = vector.load %arg4[%c0_5, %c0_6] : memref<512x128xf32, #tpu.memory_space<vmem>>, vector<512x128xf32>
    tpu.vector_store %arg4[%c0_5, %c0_6], %5 {strides = array<i32>} : memref<512x128xf32, #tpu.memory_space<vmem>>, vector<512x128xf32>,
    return
  }
  func.func @transform_0(%arg0: i32) -> (i32, i32) {
    %c0_i32 = arith.constant 0 : i32
    %c0_i32_0 = arith.constant 0 : i32
    return %arg0, %c0_i32 : i32, i32
  }
  func.func @transform_1(%arg0: i32) -> (i32, i32) {
    %c0_i32 = arith.constant 0 : i32
    %c0_i32_0 = arith.constant 0 : i32
    %c0_i32_1 = arith.constant 0 : i32
    return %c0_i32, %c0_i32_0 : i32, i32
  }
  func.func @transform_2(%arg0: i32) -> (i32, i32) {
    %c0_i32 = arith.constant 0 : i32
    %c0_i32_0 = arith.constant 0 : i32
    %c0_i32_1 = arith.constant 0 : i32
    return %c0_i32, %c0_i32_0 : i32, i32
  }
  func.func @transform_3(%arg0: i32) -> (i32, i32) {
    %c0_i32 = arith.constant 0 : i32
    %c0_i32_0 = arith.constant 0 : i32
    return %arg0, %c0_i32 : i32, i32
  }
}

</mosaic_0001>

<llo_original>
// kernel: tpu_custom_call.1
$region0: #{tpu_custom_call.1}
  #allocation0 [shape = 'u32[]', space=smem, size = 0x4, offset = 0x4, fixed_abs, tag = 'smem constant byte address 0x4 - core index']
  #allocation1 [shape = 'u32[144,128]{1,0:T(1,128)}', space=vmem, size = 0x12000, scoped, tag = 'internal scratch']
  %s0 = inlined_call_operand.hbm [shape: f32[1024,128], index: 0, kind: input, shape index: {}]
  %s1 = inlined_call_operand.hbm [shape: f32[128,128], index: 1, kind: input, shape index: {}]
  %s2 = inlined_call_operand.vmem [shape: f32[1,128], index: 2, kind: input, shape index: {}]
  %s3 = inlined_call_operand.hbm [shape: f32[1024,128], index: 3, kind: output, shape index: {}]
  %s4 = sld [smem:[#allocation0]]
  $region53: #{tpu_custom_call.1} parent=0
    _
  %s6 = ssub.s32 1, %s4
  %s7 = scalar_select 0, %s6, %s4
  $region1: #{tpu_custom_call.1} parent=0
    #allocation2 [shape = 'u8[524288]{0}', space=vmem, size = 0x80000, scoped, tag = 'input window, operand 0']
    #allocation3 [shape = 's32[2]{0}', space=sflag, size = 0x8, scoped, tag = 'scoped memory for tpu_custom_call.1']
    #allocation4 [shape = 's32[2]{0}', space=sflag, size = 0x8, scoped, tag = 'scoped memory for tpu_custom_call.1']
    #allocation5 [shape = 'u8[65536]{0}', space=vmem, size = 0x10000, scoped, tag = 'input window, operand 1, single buffered']
    #allocation6 [shape = 's32[1]{0}', space=sflag, size = 0x4, scoped, tag = 'scoped memory for tpu_custom_call.1']
    #allocation7 [shape = 'u8[524288]{0}', space=vmem, size = 0x80000, scoped, tag = 'output window, operand 0']
    %8 = vsyncpa [#allocation3], 0
    %s9 = scalar_lea.sflag [#allocation3], 1
    %10 = vsyncpa %s9, 0
    %11 = vsyncpa [#allocation6], 0
    %12 = vsyncpa [#allocation4], 0
    %s13 = scalar_lea.sflag [#allocation4], 1
    %14 = vsyncpa %s13, 0
    loop: start=0, step=1, limit=4
    $region2: #{tpu_custom_call.1} parent=1 // loop_pre_header
      _
    $region3: #{tpu_custom_call.1} parent=1 // loop_header
      %s16 = sphi 0, %s20
      %p17 = scmp.ge.s32.totalorder %s16, 4
      %s26 = sphi 0, %s28
      %s29 = sphi 0, %s26
      %s30 = sphi 0, %s29
      %s46 = sphi 0, %s30
      %s50 = sphi 0, %s50
      %s52 = sphi 0, %s50
      %s53 = sphi 0, %s52
      %s67 = sphi 0, %s53
      %s71 = sphi 0, %s71
      %s73 = sphi 0, %s71
      %s74 = sphi 0, %s73
      %s88 = sphi 0, %s74
      %s94 = sphi 0, %s96
      %s97 = sphi 0, %s94
      %s98 = sphi 0, %s97
      %s114 = sphi 0, %s98
    $region4: #{tpu_custom_call.1} parent=1 // loop_header_branch
      %19 = sbr.rel (%p17) target = $region8
    $region5: #{tpu_custom_call.1} parent=1 // loop_body
      %s21 = ssub.s32 %s16, 1
      %s22 = ssub.s32 %s16, 2
      %s23 = sadd.s32 %s16, 1
      %s24 = ssub.s32 %s16, %s23
      %p25 = scmp.eq.s32.totalorder %s24, 0
      %s27 = sadd.s32 %s26, 1
      %s28 = scalar_select %p25, %s26, %s27
      %p31 = pneg %p25
      %p32 = scmp.eq.s32.totalorder %s16, 1
      %p33 = por %p31, %p32
      %p34 = scmp.ne.s32.totalorder %s26, %s29
      %p35 = scmp.eq.s32.totalorder %s16, 0
      %p36 = por %p34, %p35
      %p37 = scmp.ne.s32.totalorder %s26, %s29
      %p38 = scmp.eq.s32.totalorder %s21, 1
      %p39 = por %p37, %p38
      %p40 = scmp.ne.s32.totalorder %s29, %s30
      %p41 = scmp.eq.s32.totalorder %s21, 0
      %p42 = por %p40, %p41
      %p43 = scmp.ne.s32.totalorder %s29, %s30
      %p44 = scmp.eq.s32.totalorder %s22, 1
      %p45 = por %p43, %p44
      %p47 = scmp.ne.s32.totalorder %s30, %s46
      %p48 = scmp.eq.s32.totalorder %s22, 0
      %p49 = por %p47, %p48
      %s51 = sadd.s32 %s50, 1
      %p54 = scmp.eq.s32.totalorder %s16, 1
      %p55 = scmp.ne.s32.totalorder %s50, %s52
      %p56 = scmp.eq.s32.totalorder %s16, 0
      %p57 = por %p55, %p56
      %p58 = scmp.ne.s32.totalorder %s50, %s52
      %p59 = scmp.eq.s32.totalorder %s21, 1
      %p60 = por %p58, %p59
      %p61 = scmp.ne.s32.totalorder %s52, %s53
      %p62 = scmp.eq.s32.totalorder %s21, 0
      %p63 = por %p61, %p62
      %p64 = scmp.ne.s32.totalorder %s52, %s53
      %p65 = scmp.eq.s32.totalorder %s22, 1
      %p66 = por %p64, %p65
      %p68 = scmp.ne.s32.totalorder %s53, %s67
      %p69 = scmp.eq.s32.totalorder %s22, 0
      %p70 = por %p68, %p69
      %s72 = sadd.s32 %s71, 1
      %p75 = scmp.eq.s32.totalorder %s16, 1
      %p76 = scmp.ne.s32.totalorder %s71, %s73
      %p77 = scmp.eq.s32.totalorder %s16, 0
      %p78 = por %p76, %p77
      %p79 = scmp.ne.s32.totalorder %s71, %s73
      %p80 = scmp.eq.s32.totalorder %s21, 1
      %p81 = por %p79, %p80
      %p82 = scmp.ne.s32.totalorder %s73, %s74
      %p83 = scmp.eq.s32.totalorder %s21, 0
      %p84 = por %p82, %p83
      %p85 = scmp.ne.s32.totalorder %s73, %s74
      %p86 = scmp.eq.s32.totalorder %s22, 1
      %p87 = por %p85, %p86
      %p89 = scmp.ne.s32.totalorder %s74, %s88
      %p90 = scmp.eq.s32.totalorder %s22, 0
      %p91 = por %p89, %p90
      %s92 = ssub.s32 %s16, %s23
      %p93 = scmp.eq.s32.totalorder %s92, 0
      %s95 = sadd.s32 %s94, 1
      %s96 = scalar_select %p93, %s94, %s95
      %p99 = pneg %p93
      %p100 = scmp.eq.s32.totalorder %s16, 1
      %p101 = por %p99, %p100
      %p102 = scmp.ne.s32.totalorder %s94, %s97
      %p103 = scmp.eq.s32.totalorder %s16, 0
      %p104 = por %p102, %p103
      %p105 = scmp.ne.s32.totalorder %s94, %s97
      %p106 = scmp.eq.s32.totalorder %s21, 1
      %p107 = por %p105, %p106
      %p108 = scmp.ne.s32.totalorder %s97, %s98
      %p109 = scmp.eq.s32.totalorder %s21, 0
      %p110 = por %p108, %p109
      %p111 = scmp.ne.s32.totalorder %s97, %s98
      %p112 = scmp.eq.s32.totalorder %s22, 1
      %p113 = por %p111, %p112
      %p115 = scmp.ne.s32.totalorder %s98, %s114
      %p116 = scmp.eq.s32.totalorder %s22, 0
      %p117 = por %p115, %p116
      %p118 = scmp.le.s32.totalorder 1, %s16
      %p119 = scmp.lt.s32.totalorder %s16, 3
      %p120 = pnand %p118, %p119
      %p121 = pneg %p120
      // Predicated region
      $region9: #{tpu_custom_call.1} parent=5 // pred_check
        _
      $region10: #{tpu_custom_call.1} parent=5 // pred_check_branch
        %123 = sbr.rel (%p120) target = $region12
      $region11: #{tpu_custom_call.1} parent=5 // pred_region
        %s124 = ssub.s32 %s16, 1
        // Predicated region
        $region13: #{tpu_custom_call.1} parent=11 // pred_check
          %p125 = pneg %p63
        $region14: #{tpu_custom_call.1} parent=11 // pred_check_branch
          %127 = sbr.rel (%p125) target = $region16
        $region15: #{tpu_custom_call.1} parent=11 // pred_region
          %s129 = ssub.s32 2048, 2048
          %130 = vsyncadd [#allocation6], %s129
          %s131 = sshll.u32 [#allocation5], 4
          %s132 = int_to_ptr.vmem [resolvable:$true] %s131
          %137 = dma.hbm_to_vmem [thread:$0]  %s1, 2048, %s132, [#allocation6], 128, 128, 8
        $region16: #{tpu_custom_call.1} parent=11 // pred_fallthru
          _
        // Predicated region
        $region17: #{tpu_custom_call.1} parent=11 // pred_check
          %p138 = pneg %p84
        $region18: #{tpu_custom_call.1} parent=11 // pred_check_branch
          %140 = sbr.rel (%p138) target = $region20
        $region19: #{tpu_custom_call.1} parent=11 // pred_region
          _
        $region20: #{tpu_custom_call.1} parent=11 // pred_fallthru
          _
      $region12: #{tpu_custom_call.1} parent=5 // pred_fallthru
        _
      %p141 = scmp.lt.s32.totalorder %s16, 2
      // Predicated region
      $region21: #{tpu_custom_call.1} parent=5 // pred_check
        %p142 = pneg %p141
      $region22: #{tpu_custom_call.1} parent=5 // pred_check_branch
        %144 = sbr.rel (%p142) target = $region24
      $region23: #{tpu_custom_call.1} parent=5 // pred_region
        // Predicated region
        $region25: #{tpu_custom_call.1} parent=23 // pred_check
          %p145 = pneg %p36
        $region26: #{tpu_custom_call.1} parent=23 // pred_check_branch
          %147 = sbr.rel (%p145) target = $region28
        $region27: #{tpu_custom_call.1} parent=23 // pred_region
          %s148 = sand.u32 %s26, 1
          %s149 = scalar_lea.sflag [#allocation3], %s148
          %s150 = sand.u32 %s26, 1
          %s151 = smul.addr %s150, 512
          %s152 = scalar_lea.vmem [#allocation2], %s151
          %s153 = smul.u32 64, %s16
          %s155 = ssub.s32 8192, 8192
          %156 = vsyncadd %s149, %s155
          %s157 = smul.addr %s153, 128
          %s158 = scalar_lea.hbm %s0, %s157
          %s159 = sshll.u32 %s152, 4
          %s160 = int_to_ptr.vmem [resolvable:$true] %s159
          %165 = dma.hbm_to_vmem [thread:$0]  %s158, 8192, %s160, %s149, 128, 128, 8
        $region28: #{tpu_custom_call.1} parent=23 // pred_fallthru
          _
      $region24: #{tpu_custom_call.1} parent=5 // pred_fallthru
        _
      %p166 = scmp.le.s32.totalorder 1, %s16
      %p167 = scmp.lt.s32.totalorder %s16, 3
      %p168 = pnand %p166, %p167
      %p169 = pneg %p168
      // Predicated region
      $region29: #{tpu_custom_call.1} parent=5 // pred_check
        _
      $region30: #{tpu_custom_call.1} parent=5 // pred_check_branch
        %171 = sbr.rel (%p168) target = $region32
      $region31: #{tpu_custom_call.1} parent=5 // pred_region
        %s172 = ssub.s32 %s16, 1
        %s173 = sand.u32 %s29, 1
        %s174 = scalar_lea.sflag [#allocation3], %s173
        %s175 = sand.u32 %s29, 1
        %s176 = smul.addr %s175, 512
        %s177 = scalar_lea.vmem [#allocation2], %s176
        // Predicated region
        $region33: #{tpu_custom_call.1} parent=31 // pred_check
          %p178 = pneg %p42
        $region34: #{tpu_custom_call.1} parent=31 // pred_check_branch
          %180 = sbr.rel (%p178) target = $region36
        $region35: #{tpu_custom_call.1} parent=31 // pred_region
          %181 = dma.done %s174, 8192
        $region36: #{tpu_custom_call.1} parent=31 // pred_fallthru
          _
        // Predicated region
        $region37: #{tpu_custom_call.1} parent=31 // pred_check
          %p182 = pneg %p63
        $region38: #{tpu_custom_call.1} parent=31 // pred_check_branch
          %184 = sbr.rel (%p182) target = $region40
        $region39: #{tpu_custom_call.1} parent=31 // pred_region
          %185 = dma.done [#allocation6], 2048
        $region40: #{tpu_custom_call.1} parent=31 // pred_fallthru
          _
        %s186 = sand.u32 %s29, 1
        %s187 = scalar_lea.sflag [#allocation3], %s186
        %s188 = sand.u32 %s29, 1
        %s189 = smul.addr %s188, 512
        %s190 = scalar_lea.vmem [#allocation2], %s189
        %p191 = pneg %p42
        %p192 = pneg %p39
        %p193 = pneg %p63
        %p194 = pneg %p60
        %p195 = pneg %p84
        %p196 = pneg %p81
        %p197 = pneg %p110
        %p198 = pneg %p107
        %s199 = sand.u32 %s97, 1
        %s200 = scalar_lea.sflag [#allocation4], %s199
        %s201 = sand.u32 %s97, 1
        %s202 = smul.addr %s201, 512
        %s203 = scalar_lea.vmem [#allocation7], %s202
        %s204 = smul.u32 64, %s21
        %s205 = smul.u32 64, %s21
        %v206 = vld [vmem:[%s177] sm:$0xff]
        %v207 = vld [vmem:[%s177 + $0x8] sm:$0xff]
        %v208 = vld [vmem:[%s177 + $0x10] sm:$0xff]
        %v209 = vld [vmem:[%s177 + $0x18] sm:$0xff]
        %v210 = vld [vmem:[%s177 + $0x20] sm:$0xff]
        %v211 = vld [vmem:[%s177 + $0x28] sm:$0xff]
        %v212 = vld [vmem:[%s177 + $0x30] sm:$0xff]
        %v213 = vld [vmem:[%s177 + $0x38] sm:$0xff]
        %v214 = vld [vmem:[%s177 + $0x40] sm:$0xff]
        %v215 = vld [vmem:[%s177 + $0x48] sm:$0xff]
        %v216 = vld [vmem:[%s177 + $0x50] sm:$0xff]
        %v217 = vld [vmem:[%s177 + $0x58] sm:$0xff]
        %v218 = vld [vmem:[%s177 + $0x60] sm:$0xff]
        %v219 = vld [vmem:[%s177 + $0x68] sm:$0xff]
        %v220 = vld [vmem:[%s177 + $0x70] sm:$0xff]
        %v221 = vld [vmem:[%s177 + $0x78] sm:$0xff]
        %v222 = vld [vmem:[%s177 + $0x80] sm:$0xff]
        %v223 = vld [vmem:[%s177 + $0x88] sm:$0xff]
        %v224 = vld [vmem:[%s177 + $0x90] sm:$0xff]
        %v225 = vld [vmem:[%s177 + $0x98] sm:$0xff]
        %v226 = vld [vmem:[%s177 + $0xa0] sm:$0xff]
        %v227 = vld [vmem:[%s177 + $0xa8] sm:$0xff]
        %v228 = vld [vmem:[%s177 + $0xb0] sm:$0xff]
        %v229 = vld [vmem:[%s177 + $0xb8] sm:$0xff]
        %v230 = vld [vmem:[%s177 + $0xc0] sm:$0xff]
        %v231 = vld [vmem:[%s177 + $0xc8] sm:$0xff]
        %v232 = vld [vmem:[%s177 + $0xd0] sm:$0xff]
        %v233 = vld [vmem:[%s177 + $0xd8] sm:$0xff]
        %v234 = vld [vmem:[%s177 + $0xe0] sm:$0xff]
        %v235 = vld [vmem:[%s177 + $0xe8] sm:$0xff]
        %v236 = vld [vmem:[%s177 + $0xf0] sm:$0xff]
        %v237 = vld [vmem:[%s177 + $0xf8] sm:$0xff]
        %v238 = vld [vmem:[%s177 + $0x100] sm:$0xff]
        %v239 = vld [vmem:[%s177 + $0x108] sm:$0xff]
        %v240 = vld [vmem:[%s177 + $0x110] sm:$0xff]
        %v241 = vld [vmem:[%s177 + $0x118] sm:$0xff]
        %v242 = vld [vmem:[%s177 + $0x120] sm:$0xff]
        %v243 = vld [vmem:[%s177 + $0x128] sm:$0xff]
        %v244 = vld [vmem:[%s177 + $0x130] sm:$0xff]
        %v245 = vld [vmem:[%s177 + $0x138] sm:$0xff]
        %v246 = vld [vmem:[%s177 + $0x140] sm:$0xff]
        %v247 = vld [vmem:[%s177 + $0x148] sm:$0xff]
        %v248 = vld [vmem:[%s177 + $0x150] sm:$0xff]
        %v249 = vld [vmem:[%s177 + $0x158] sm:$0xff]
        %v250 = vld [vmem:[%s177 + $0x160] sm:$0xff]
        %v251 = vld [vmem:[%s177 + $0x168] sm:$0xff]
        %v252 = vld [vmem:[%s177 + $0x170] sm:$0xff]
        %v253 = vld [vmem:[%s177 + $0x178] sm:$0xff]
        %v254 = vld [vmem:[%s177 + $0x180] sm:$0xff]
        %v255 = vld [vmem:[%s177 + $0x188] sm:$0xff]
        %v256 = vld [vmem:[%s177 + $0x190] sm:$0xff]
        %v257 = vld [vmem:[%s177 + $0x198] sm:$0xff]
        %v258 = vld [vmem:[%s177 + $0x1a0] sm:$0xff]
        %v259 = vld [vmem:[%s177 + $0x1a8] sm:$0xff]
        %v260 = vld [vmem:[%s177 + $0x1b0] sm:$0xff]
        %v261 = vld [vmem:[%s177 + $0x1b8] sm:$0xff]
        %v262 = vld [vmem:[%s177 + $0x1c0] sm:$0xff]
        %v263 = vld [vmem:[%s177 + $0x1c8] sm:$0xff]
        %v264 = vld [vmem:[%s177 + $0x1d0] sm:$0xff]
        %v265 = vld [vmem:[%s177 + $0x1d8] sm:$0xff]
        %v266 = vld [vmem:[%s177 + $0x1e0] sm:$0xff]
        %v267 = vld [vmem:[%s177 + $0x1e8] sm:$0xff]
        %v268 = vld [vmem:[%s177 + $0x1f0] sm:$0xff]
        %v269 = vld [vmem:[%s177 + $0x1f8] sm:$0xff]
        %v270 = vld [vmem:[#allocation5] sm:$0xff]
        %v271 = vld [vmem:[#allocation5 + $0x8] sm:$0xff]
        %v272 = vld [vmem:[#allocation5 + $0x10] sm:$0xff]
        %v273 = vld [vmem:[#allocation5 + $0x18] sm:$0xff]
        %v274 = vld [vmem:[#allocation5 + $0x20] sm:$0xff]
        %v275 = vld [vmem:[#allocation5 + $0x28] sm:$0xff]
        %v276 = vld [vmem:[#allocation5 + $0x30] sm:$0xff]
        %v277 = vld [vmem:[#allocation5 + $0x38] sm:$0xff]
        %v278 = vld [vmem:[#allocation5 + $0x40] sm:$0xff]
        %v279 = vld [vmem:[#allocation5 + $0x48] sm:$0xff]
        %v280 = vld [vmem:[#allocation5 + $0x50] sm:$0xff]
        %v281 = vld [vmem:[#allocation5 + $0x58] sm:$0xff]
        %v282 = vld [vmem:[#allocation5 + $0x60] sm:$0xff]
        %v283 = vld [vmem:[#allocation5 + $0x68] sm:$0xff]
        %v284 = vld [vmem:[#allocation5 + $0x70] sm:$0xff]
        %v285 = vld [vmem:[#allocation5 + $0x78] sm:$0xff]
        %v286 = vld [vmem:[%s2] sm:$0x1]
        %v288 = vlaneseq
        %v289 = vshrl.u32 %v288, 7
        %v290 = vsub.s32 0, %v289
        %v291 = vrot.slane %v286, %v290
        %293 = vmatprep.subr.mxu0 0.0
        %294 = vmatpush1.msra.mxu0 %v270
        %295 = vmatprep.subr.mxu0 0.0
        %296 = vmatpush1.msra.mxu0 %v271
        %297 = vmatprep.subr.mxu0 0.0
        %298 = vmatpush1.msra.mxu0 %v272
        %299 = vmatprep.subr.mxu0 0.0
        %300 = vmatpush1.msra.mxu0 %v273
        %301 = vmatprep.subr.mxu0 0.0
        %302 = vmatpush1.msra.mxu0 %v274
        %303 = vmatprep.subr.mxu0 0.0
        %304 = vmatpush1.msra.mxu0 %v275
        %305 = vmatprep.subr.mxu0 0.0
        %306 = vmatpush1.msra.mxu0 %v276
        %307 = vmatprep.subr.mxu0 0.0
        %308 = vmatpush1.msra.mxu0 %v277
        %309 = vmatprep.subr.mxu0 0.0
        %310 = vmatpush1.msra.mxu0 %v278
        %311 = vmatprep.subr.mxu0 0.0
        %312 = vmatpush1.msra.mxu0 %v279
        %313 = vmatprep.subr.mxu0 0.0
        %314 = vmatpush1.msra.mxu0 %v280
        %315 = vmatprep.subr.mxu0 0.0
        %316 = vmatpush1.msra.mxu0 %v281
        %317 = vmatprep.subr.mxu0 0.0
        %318 = vmatpush1.msra.mxu0 %v282
        %319 = vmatprep.subr.mxu0 0.0
        %320 = vmatpush1.msra.mxu0 %v283
        %321 = vmatprep.subr.mxu0 0.0
        %322 = vmatpush1.msra.mxu0 %v284
        %323 = vmatprep.subr.mxu0 0.0
        %324 = vmatpush1.msra.mxu0 %v285
        %325 = vmatprep.subr.mxu0 0.0
        %326 = vmatpush1.msra.mxu0 0.0
        %327 = vmatprep.subr.mxu0 0.0
        %328 = vmatpush1.msra.mxu0 0.0
        %329 = vmatprep.subr.mxu0 0.0
        %330 = vmatpush1.msra.mxu0 0.0
        %331 = vmatprep.subr.mxu0 0.0
        %332 = vmatpush1.msra.mxu0 0.0
        %333 = vmatprep.subr.mxu0 0.0
        %334 = vmatpush1.msra.mxu0 0.0
        %335 = vmatprep.subr.mxu0 0.0
        %336 = vmatpush1.msra.mxu0 0.0
        %337 = vmatprep.subr.mxu0 0.0
        %338 = vmatpush1.msra.mxu0 0.0
        %339 = vmatprep.subr.mxu0 0.0
        %340 = vmatpush1.msra.mxu0 0.0
        %341 = vmatprep.subr.mxu0 0.0
        %342 = vmatpush1.msra.mxu0 0.0
        %343 = vmatprep.subr.mxu0 0.0
        %344 = vmatpush1.msra.mxu0 0.0
        %345 = vmatprep.subr.mxu0 0.0
        %346 = vmatpush1.msra.mxu0 0.0
        %347 = vmatprep.subr.mxu0 0.0
        %348 = vmatpush1.msra.mxu0 0.0
        %349 = vmatprep.subr.mxu0 0.0
        %350 = vmatpush1.msra.mxu0 0.0
        %351 = vmatprep.subr.mxu0 0.0
        %352 = vmatpush1.msra.mxu0 0.0
        %353 = vmatprep.subr.mxu0 0.0
        %354 = vmatpush1.msra.mxu0 0.0
        %355 = vmatprep.subr.mxu0 0.0
        %356 = vmatpush1.msra.mxu0 0.0
        %357 = vmatprep.mubr.f32.mxu0 0.0
        %358 = vmatmul.mubr.f32.gmra.mrb[0].mxu0 %v206
        %v359 = vpop.f32.mrb[0].mxu0
        %v360 = vadd.f32 %v291, %v359
        %v361 = vpop.f32.mrb[0].mxu0
        %362 = vmatprep.mubr.f32.mxu0 0.0
        %363 = vmatmul.mubr.f32.gmra.mrb[0].mxu0 %v207
        %v364 = vpop.f32.mrb[0].mxu0
        %v365 = vadd.f32 %v291, %v364
        %v366 = vpop.f32.mrb[0].mxu0
        %367 = vmatprep.mubr.f32.mxu0 0.0
        %368 = vmatmul.mubr.f32.gmra.mrb[0].mxu0 %v208
        %v369 = vpop.f32.mrb[0].mxu0
        %v370 = vadd.f32 %v291, %v369
        %v371 = vpop.f32.mrb[0].mxu0
        %372 = vmatprep.mubr.f32.mxu0 0.0
        %373 = vmatmul.mubr.f32.gmra.mrb[0].mxu0 %v209
        %v374 = vpop.f32.mrb[0].mxu0
        %v375 = vadd.f32 %v291, %v374
        %v376 = vpop.f32.mrb[0].mxu0
        %377 = vmatprep.mubr.f32.mxu0 0.0
        %378 = vmatmul.mubr.f32.gmra.mrb[0].mxu0 %v210
        %v379 = vpop.f32.mrb[0].mxu0
        %v380 = vadd.f32 %v291, %v379
        %v381 = vpop.f32.mrb[0].mxu0
        %382 = vmatprep.mubr.f32.mxu0 0.0
        %383 = vmatmul.mubr.f32.gmra.mrb[0].mxu0 %v211
        %v384 = vpop.f32.mrb[0].mxu0
        %v385 = vadd.f32 %v291, %v384
        %v386 = vpop.f32.mrb[0].mxu0
        %387 = vmatprep.mubr.f32.mxu0 0.0
        %388 = vmatmul.mubr.f32.gmra.mrb[0].mxu0 %v212
        %v389 = vpop.f32.mrb[0].mxu0
        %v390 = vadd.f32 %v291, %v389
        %v391 = vpop.f32.mrb[0].mxu0
        %392 = vmatprep.mubr.f32.mxu0 0.0
        %393 = vmatmul.mubr.f32.gmra.mrb[0].mxu0 %v213
        %v394 = vpop.f32.mrb[0].mxu0
        %v395 = vadd.f32 %v291, %v394
        %v396 = vpop.f32.mrb[0].mxu0
        %397 = vmatprep.mubr.f32.mxu0 0.0
        %398 = vmatmul.mubr.f32.gmra.mrb[0].mxu0 %v214
        %v399 = vpop.f32.mrb[0].mxu0
        %v400 = vadd.f32 %v291, %v399
        %v401 = vpop.f32.mrb[0].mxu0
        %402 = vmatprep.mubr.f32.mxu0 0.0
        %403 = vmatmul.mubr.f32.gmra.mrb[0].mxu0 %v215
        %v404 = vpop.f32.mrb[0].mxu0
        %v405 = vadd.f32 %v291, %v404
        %v406 = vpop.f32.mrb[0].mxu0
        %407 = vmatprep.mubr.f32.mxu0 0.0
        %408 = vmatmul.mubr.f32.gmra.mrb[0].mxu0 %v216
        %v409 = vpop.f32.mrb[0].mxu0
        %v410 = vadd.f32 %v291, %v409
        %v411 = vpop.f32.mrb[0].mxu0
        %412 = vmatprep.mubr.f32.mxu0 0.0
        %413 = vmatmul.mubr.f32.gmra.mrb[0].mxu0 %v217
        %v414 = vpop.f32.mrb[0].mxu0
        %v415 = vadd.f32 %v291, %v414
        %v416 = vpop.f32.mrb[0].mxu0
        %417 = vmatprep.mubr.f32.mxu0 0.0
        %418 = vmatmul.mubr.f32.gmra.mrb[0].mxu0 %v218
        %v419 = vpop.f32.mrb[0].mxu0
        %v420 = vadd.f32 %v291, %v419
        %v421 = vpop.f32.mrb[0].mxu0
        %422 = vmatprep.mubr.f32.mxu0 0.0
        %423 = vmatmul.mubr.f32.gmra.mrb[0].mxu0 %v219
        %v424 = vpop.f32.mrb[0].mxu0
        %v425 = vadd.f32 %v291, %v424
        %v426 = vpop.f32.mrb[0].mxu0
        %427 = vmatprep.mubr.f32.mxu0 0.0
        %428 = vmatmul.mubr.f32.gmra.mrb[0].mxu0 %v220
        %v429 = vpop.f32.mrb[0].mxu0
        %v430 = vadd.f32 %v291, %v429
        %v431 = vpop.f32.mrb[0].mxu0
        %432 = vmatprep.mubr.f32.mxu0 0.0
        %433 = vmatmul.mubr.f32.gmra.mrb[0].mxu0 %v221
        %v434 = vpop.f32.mrb[0].mxu0
        %v435 = vadd.f32 %v291, %v434
        %v436 = vpop.f32.mrb[0].mxu0
        %437 = vmatprep.mubr.f32.mxu0 0.0
        %438 = vmatmul.mubr.f32.gmra.mrb[0].mxu0 %v222
        %v439 = vpop.f32.mrb[0].mxu0
        %v440 = vadd.f32 %v291, %v439
        %v441 = vpop.f32.mrb[0].mxu0
        %442 = vmatprep.mubr.f32.mxu0 0.0
        %443 = vmatmul.mubr.f32.gmra.mrb[0].mxu0 %v223
        %v444 = vpop.f32.mrb[0].mxu0
        %v445 = vadd.f32 %v291, %v444
        %v446 = vpop.f32.mrb[0].mxu0
        %447 = vmatprep.mubr.f32.mxu0 0.0
        %448 = vmatmul.mubr.f32.gmra.mrb[0].mxu0 %v224
        %v449 = vpop.f32.mrb[0].mxu0
        %v450 = vadd.f32 %v291, %v449
        %v451 = vpop.f32.mrb[0].mxu0
        %452 = vmatprep.mubr.f32.mxu0 0.0
        %453 = vmatmul.mubr.f32.gmra.mrb[0].mxu0 %v225
        %v454 = vpop.f32.mrb[0].mxu0
        %v455 = vadd.f32 %v291, %v454
        %v456 = vpop.f32.mrb[0].mxu0
        %457 = vmatprep.mubr.f32.mxu0 0.0
        %458 = vmatmul.mubr.f32.gmra.mrb[0].mxu0 %v226
        %v459 = vpop.f32.mrb[0].mxu0
        %v460 = vadd.f32 %v291, %v459
        %v461 = vpop.f32.mrb[0].mxu0
        %462 = vmatprep.mubr.f32.mxu0 0.0
        %463 = vmatmul.mubr.f32.gmra.mrb[0].mxu0 %v227
        %v464 = vpop.f32.mrb[0].mxu0
        %v465 = vadd.f32 %v291, %v464
        %v466 = vpop.f32.mrb[0].mxu0
        %467 = vmatprep.mubr.f32.mxu0 0.0
        %468 = vmatmul.mubr.f32.gmra.mrb[0].mxu0 %v228
        %v469 = vpop.f32.mrb[0].mxu0
        %v470 = vadd.f32 %v291, %v469
        %v471 = vpop.f32.mrb[0].mxu0
        %472 = vmatprep.mubr.f32.mxu0 0.0
        %473 = vmatmul.mubr.f32.gmra.mrb[0].mxu0 %v229
        %v474 = vpop.f32.mrb[0].mxu0
        %v475 = vadd.f32 %v291, %v474
        %v476 = vpop.f32.mrb[0].mxu0
        %477 = vmatprep.mubr.f32.mxu0 0.0
        %478 = vmatmul.mubr.f32.gmra.mrb[0].mxu0 %v230
        %v479 = vpop.f32.mrb[0].mxu0
        %v480 = vadd.f32 %v291, %v479
        %v481 = vpop.f32.mrb[0].mxu0
        %482 = vmatprep.mubr.f32.mxu0 0.0
        %483 = vmatmul.mubr.f32.gmra.mrb[0].mxu0 %v231
        %v484 = vpop.f32.mrb[0].mxu0
        %v485 = vadd.f32 %v291, %v484
        %v486 = vpop.f32.mrb[0].mxu0
        %487 = vmatprep.mubr.f32.mxu0 0.0
        %488 = vmatmul.mubr.f32.gmra.mrb[0].mxu0 %v232
        %v489 = vpop.f32.mrb[0].mxu0
        %v490 = vadd.f32 %v291, %v489
        %v491 = vpop.f32.mrb[0].mxu0
        %492 = vmatprep.mubr.f32.mxu0 0.0
        %493 = vmatmul.mubr.f32.gmra.mrb[0].mxu0 %v233
        %v494 = vpop.f32.mrb[0].mxu0
        %v495 = vadd.f32 %v291, %v494
        %v496 = vpop.f32.mrb[0].mxu0
        %497 = vmatprep.mubr.f32.mxu0 0.0
        %498 = vmatmul.mubr.f32.gmra.mrb[0].mxu0 %v234
        %v499 = vpop.f32.mrb[0].mxu0
        %v500 = vadd.f32 %v291, %v499
        %v501 = vpop.f32.mrb[0].mxu0
        %502 = vmatprep.mubr.f32.mxu0 0.0
        %503 = vmatmul.mubr.f32.gmra.mrb[0].mxu0 %v235
        %v504 = vpop.f32.mrb[0].mxu0
        %v505 = vadd.f32 %v291, %v504
        %v506 = vpop.f32.mrb[0].mxu0
        %507 = vmatprep.mubr.f32.mxu0 0.0
        %508 = vmatmul.mubr.f32.gmra.mrb[0].mxu0 %v236
        %v509 = vpop.f32.mrb[0].mxu0
        %v510 = vadd.f32 %v291, %v509
        %v511 = vpop.f32.mrb[0].mxu0
        %512 = vmatprep.mubr.f32.mxu0 0.0
        %513 = vmatmul.mubr.f32.gmra.mrb[0].mxu0 %v237
        %v514 = vpop.f32.mrb[0].mxu0
        %v515 = vadd.f32 %v291, %v514
        %v516 = vpop.f32.mrb[0].mxu0
        %517 = vmatprep.mubr.f32.mxu0 0.0
        %518 = vmatmul.mubr.f32.gmra.mrb[0].mxu0 %v238
        %v519 = vpop.f32.mrb[0].mxu0
        %v520 = vadd.f32 %v291, %v519
        %v521 = vpop.f32.mrb[0].mxu0
        %522 = vmatprep.mubr.f32.mxu0 0.0
        %523 = vmatmul.mubr.f32.gmra.mrb[0].mxu0 %v239
        %v524 = vpop.f32.mrb[0].mxu0
        %v525 = vadd.f32 %v291, %v524
        %v526 = vpop.f32.mrb[0].mxu0
        %527 = vmatprep.mubr.f32.mxu0 0.0
        %528 = vmatmul.mubr.f32.gmra.mrb[0].mxu0 %v240
        %v529 = vpop.f32.mrb[0].mxu0
        %v530 = vadd.f32 %v291, %v529
        %v531 = vpop.f32.mrb[0].mxu0
        %532 = vmatprep.mubr.f32.mxu0 0.0
        %533 = vmatmul.mubr.f32.gmra.mrb[0].mxu0 %v241
        %v534 = vpop.f32.mrb[0].mxu0
        %v535 = vadd.f32 %v291, %v534
        %v536 = vpop.f32.mrb[0].mxu0
        %537 = vmatprep.mubr.f32.mxu0 0.0
        %538 = vmatmul.mubr.f32.gmra.mrb[0].mxu0 %v242
        %v539 = vpop.f32.mrb[0].mxu0
        %v540 = vadd.f32 %v291, %v539
        %v541 = vpop.f32.mrb[0].mxu0
        %542 = vmatprep.mubr.f32.mxu0 0.0
        %543 = vmatmul.mubr.f32.gmra.mrb[0].mxu0 %v243
        %v544 = vpop.f32.mrb[0].mxu0
        %v545 = vadd.f32 %v291, %v544
        %v546 = vpop.f32.mrb[0].mxu0
        %547 = vmatprep.mubr.f32.mxu0 0.0
        %548 = vmatmul.mubr.f32.gmra.mrb[0].mxu0 %v244
        %v549 = vpop.f32.mrb[0].mxu0
        %v550 = vadd.f32 %v291, %v549
        %v551 = vpop.f32.mrb[0].mxu0
        %552 = vmatprep.mubr.f32.mxu0 0.0
        %553 = vmatmul.mubr.f32.gmra.mrb[0].mxu0 %v245
        %v554 = vpop.f32.mrb[0].mxu0
        %v555 = vadd.f32 %v291, %v554
        %v556 = vpop.f32.mrb[0].mxu0
        %557 = vmatprep.mubr.f32.mxu0 0.0
        %558 = vmatmul.mubr.f32.gmra.mrb[0].mxu0 %v246
        %v559 = vpop.f32.mrb[0].mxu0
        %v560 = vadd.f32 %v291, %v559
        %v561 = vpop.f32.mrb[0].mxu0
        %562 = vmatprep.mubr.f32.mxu0 0.0
        %563 = vmatmul.mubr.f32.gmra.mrb[0].mxu0 %v247
        %v564 = vpop.f32.mrb[0].mxu0
        %v565 = vadd.f32 %v291, %v564
        %v566 = vpop.f32.mrb[0].mxu0
        %567 = vmatprep.mubr.f32.mxu0 0.0
        %568 = vmatmul.mubr.f32.gmra.mrb[0].mxu0 %v248
        %v569 = vpop.f32.mrb[0].mxu0
        %v570 = vadd.f32 %v291, %v569
        %v571 = vpop.f32.mrb[0].mxu0
        %572 = vmatprep.mubr.f32.mxu0 0.0
        %573 = vmatmul.mubr.f32.gmra.mrb[0].mxu0 %v249
        %v574 = vpop.f32.mrb[0].mxu0
        %v575 = vadd.f32 %v291, %v574
        %v576 = vpop.f32.mrb[0].mxu0
        %577 = vmatprep.mubr.f32.mxu0 0.0
        %578 = vmatmul.mubr.f32.gmra.mrb[0].mxu0 %v250
        %v579 = vpop.f32.mrb[0].mxu0
        %v580 = vadd.f32 %v291, %v579
        %v581 = vpop.f32.mrb[0].mxu0
        %582 = vmatprep.mubr.f32.mxu0 0.0
        %583 = vmatmul.mubr.f32.gmra.mrb[0].mxu0 %v251
        %v584 = vpop.f32.mrb[0].mxu0
        %v585 = vadd.f32 %v291, %v584
        %v586 = vpop.f32.mrb[0].mxu0
        %587 = vmatprep.mubr.f32.mxu0 0.0
        %588 = vmatmul.mubr.f32.gmra.mrb[0].mxu0 %v252
        %v589 = vpop.f32.mrb[0].mxu0
        %v590 = vadd.f32 %v291, %v589
        %v591 = vpop.f32.mrb[0].mxu0
        %592 = vmatprep.mubr.f32.mxu0 0.0
        %593 = vmatmul.mubr.f32.gmra.mrb[0].mxu0 %v253
        %v594 = vpop.f32.mrb[0].mxu0
        %v595 = vadd.f32 %v291, %v594
        %v596 = vpop.f32.mrb[0].mxu0
        %597 = vmatprep.mubr.f32.mxu0 0.0
        %598 = vmatmul.mubr.f32.gmra.mrb[0].mxu0 %v254
        %v599 = vpop.f32.mrb[0].mxu0
        %v600 = vadd.f32 %v291, %v599
        %v601 = vpop.f32.mrb[0].mxu0
        %602 = vmatprep.mubr.f32.mxu0 0.0
        %603 = vmatmul.mubr.f32.gmra.mrb[0].mxu0 %v255
        %v604 = vpop.f32.mrb[0].mxu0
        %v605 = vadd.f32 %v291, %v604
        %v606 = vpop.f32.mrb[0].mxu0
        %607 = vmatprep.mubr.f32.mxu0 0.0
        %608 = vmatmul.mubr.f32.gmra.mrb[0].mxu0 %v256
        %v609 = vpop.f32.mrb[0].mxu0
        %v610 = vadd.f32 %v291, %v609
        %v611 = vpop.f32.mrb[0].mxu0
        %612 = vmatprep.mubr.f32.mxu0 0.0
        %613 = vmatmul.mubr.f32.gmra.mrb[0].mxu0 %v257
        %v614 = vpop.f32.mrb[0].mxu0
        %v615 = vadd.f32 %v291, %v614
        %v616 = vpop.f32.mrb[0].mxu0
        %617 = vmatprep.mubr.f32.mxu0 0.0
        %618 = vmatmul.mubr.f32.gmra.mrb[0].mxu0 %v258
        %v619 = vpop.f32.mrb[0].mxu0
        %v620 = vadd.f32 %v291, %v619
        %v621 = vpop.f32.mrb[0].mxu0
        %622 = vmatprep.mubr.f32.mxu0 0.0
        %623 = vmatmul.mubr.f32.gmra.mrb[0].mxu0 %v259
        %v624 = vpop.f32.mrb[0].mxu0
        %v625 = vadd.f32 %v291, %v624
        %v626 = vpop.f32.mrb[0].mxu0
        %627 = vmatprep.mubr.f32.mxu0 0.0
        %628 = vmatmul.mubr.f32.gmra.mrb[0].mxu0 %v260
        %v629 = vpop.f32.mrb[0].mxu0
        %v630 = vadd.f32 %v291, %v629
        %v631 = vpop.f32.mrb[0].mxu0
        %632 = vmatprep.mubr.f32.mxu0 0.0
        %633 = vmatmul.mubr.f32.gmra.mrb[0].mxu0 %v261
        %v634 = vpop.f32.mrb[0].mxu0
        %v635 = vadd.f32 %v291, %v634
        %v636 = vpop.f32.mrb[0].mxu0
        %637 = vmatprep.mubr.f32.mxu0 0.0
        %638 = vmatmul.mubr.f32.gmra.mrb[0].mxu0 %v262
        %v639 = vpop.f32.mrb[0].mxu0
        %v640 = vadd.f32 %v291, %v639
        %v641 = vpop.f32.mrb[0].mxu0
        %642 = vmatprep.mubr.f32.mxu0 0.0
        %643 = vmatmul.mubr.f32.gmra.mrb[0].mxu0 %v263
        %v644 = vpop.f32.mrb[0].mxu0
        %v645 = vadd.f32 %v291, %v644
        %v646 = vpop.f32.mrb[0].mxu0
        %647 = vmatprep.mubr.f32.mxu0 0.0
        %648 = vmatmul.mubr.f32.gmra.mrb[0].mxu0 %v264
        %v649 = vpop.f32.mrb[0].mxu0
        %v650 = vadd.f32 %v291, %v649
        %v651 = vpop.f32.mrb[0].mxu0
        %652 = vmatprep.mubr.f32.mxu0 0.0
        %653 = vmatmul.mubr.f32.gmra.mrb[0].mxu0 %v265
        %v654 = vpop.f32.mrb[0].mxu0
        %v655 = vadd.f32 %v291, %v654
        %v656 = vpop.f32.mrb[0].mxu0
        %657 = vmatprep.mubr.f32.mxu0 0.0
        %658 = vmatmul.mubr.f32.gmra.mrb[0].mxu0 %v266
        %v659 = vpop.f32.mrb[0].mxu0
        %v660 = vadd.f32 %v291, %v659
        %v661 = vpop.f32.mrb[0].mxu0
        %662 = vmatprep.mubr.f32.mxu0 0.0
        %663 = vmatmul.mubr.f32.gmra.mrb[0].mxu0 %v267
        %v664 = vpop.f32.mrb[0].mxu0
        %v665 = vadd.f32 %v291, %v664
        %v666 = vpop.f32.mrb[0].mxu0
        %667 = vmatprep.mubr.f32.mxu0 0.0
        %668 = vmatmul.mubr.f32.gmra.mrb[0].mxu0 %v268
        %v669 = vpop.f32.mrb[0].mxu0
        %v670 = vadd.f32 %v291, %v669
        %v671 = vpop.f32.mrb[0].mxu0
        %672 = vmatprep.mubr.f32.mxu0 0.0
        %673 = vmatmul.mubr.f32.gmra.mrb[0].mxu0 %v269
        %v674 = vpop.f32.mrb[0].mxu0
        %v675 = vadd.f32 %v291, %v674
        %v676 = vpop.f32.mrb[0].mxu0
        %677 = vdwg.mxu0
        %678 = vst [vmem:[%s203] sm:$0xff] %v360
        %679 = vst [vmem:[%s203 + $0x8] sm:$0xff] %v365
        %680 = vst [vmem:[%s203 + $0x10] sm:$0xff] %v370
        %681 = vst [vmem:[%s203 + $0x18] sm:$0xff] %v375
        %682 = vst [vmem:[%s203 + $0x20] sm:$0xff] %v380
        %683 = vst [vmem:[%s203 + $0x28] sm:$0xff] %v385
        %684 = vst [vmem:[%s203 + $0x30] sm:$0xff] %v390
        %685 = vst [vmem:[%s203 + $0x38] sm:$0xff] %v395
        %686 = vst [vmem:[%s203 + $0x40] sm:$0xff] %v400
        %687 = vst [vmem:[%s203 + $0x48] sm:$0xff] %v405
        %688 = vst [vmem:[%s203 + $0x50] sm:$0xff] %v410
        %689 = vst [vmem:[%s203 + $0x58] sm:$0xff] %v415
        %690 = vst [vmem:[%s203 + $0x60] sm:$0xff] %v420
        %691 = vst [vmem:[%s203 + $0x68] sm:$0xff] %v425
        %692 = vst [vmem:[%s203 + $0x70] sm:$0xff] %v430
        %693 = vst [vmem:[%s203 + $0x78] sm:$0xff] %v435
        %694 = vst [vmem:[%s203 + $0x80] sm:$0xff] %v440
        %695 = vst [vmem:[%s203 + $0x88] sm:$0xff] %v445
        %696 = vst [vmem:[%s203 + $0x90] sm:$0xff] %v450
        %697 = vst [vmem:[%s203 + $0x98] sm:$0xff] %v455
        %698 = vst [vmem:[%s203 + $0xa0] sm:$0xff] %v460
        %699 = vst [vmem:[%s203 + $0xa8] sm:$0xff] %v465
        %700 = vst [vmem:[%s203 + $0xb0] sm:$0xff] %v470
        %701 = vst [vmem:[%s203 + $0xb8] sm:$0xff] %v475
        %702 = vst [vmem:[%s203 + $0xc0] sm:$0xff] %v480
        %703 = vst [vmem:[%s203 + $0xc8] sm:$0xff] %v485
        %704 = vst [vmem:[%s203 + $0xd0] sm:$0xff] %v490
        %705 = vst [vmem:[%s203 + $0xd8] sm:$0xff] %v495
        %706 = vst [vmem:[%s203 + $0xe0] sm:$0xff] %v500
        %707 = vst [vmem:[%s203 + $0xe8] sm:$0xff] %v505
        %708 = vst [vmem:[%s203 + $0xf0] sm:$0xff] %v510
        %709 = vst [vmem:[%s203 + $0xf8] sm:$0xff] %v515
        %710 = vst [vmem:[%s203 + $0x100] sm:$0xff] %v520
        %711 = vst [vmem:[%s203 + $0x108] sm:$0xff] %v525
        %712 = vst [vmem:[%s203 + $0x110] sm:$0xff] %v530
        %713 = vst [vmem:[%s203 + $0x118] sm:$0xff] %v535
        %714 = vst [vmem:[%s203 + $0x120] sm:$0xff] %v540
        %715 = vst [vmem:[%s203 + $0x128] sm:$0xff] %v545
        %716 = vst [vmem:[%s203 + $0x130] sm:$0xff] %v550
        %717 = vst [vmem:[%s203 + $0x138] sm:$0xff] %v555
        %718 = vst [vmem:[%s203 + $0x140] sm:$0xff] %v560
        %719 = vst [vmem:[%s203 + $0x148] sm:$0xff] %v565
        %720 = vst [vmem:[%s203 + $0x150] sm:$0xff] %v570
        %721 = vst [vmem:[%s203 + $0x158] sm:$0xff] %v575
        %722 = vst [vmem:[%s203 + $0x160] sm:$0xff] %v580
        %723 = vst [vmem:[%s203 + $0x168] sm:$0xff] %v585
        %724 = vst [vmem:[%s203 + $0x170] sm:$0xff] %v590
        %725 = vst [vmem:[%s203 + $0x178] sm:$0xff] %v595
        %726 = vst [vmem:[%s203 + $0x180] sm:$0xff] %v600
        %727 = vst [vmem:[%s203 + $0x188] sm:$0xff] %v605
        %728 = vst [vmem:[%s203 + $0x190] sm:$0xff] %v610
        %729 = vst [vmem:[%s203 + $0x198] sm:$0xff] %v615
        %730 = vst [vmem:[%s203 + $0x1a0] sm:$0xff] %v620
        %731 = vst [vmem:[%s203 + $0x1a8] sm:$0xff] %v625
        %732 = vst [vmem:[%s203 + $0x1b0] sm:$0xff] %v630
        %733 = vst [vmem:[%s203 + $0x1b8] sm:$0xff] %v635
        %734 = vst [vmem:[%s203 + $0x1c0] sm:$0xff] %v640
        %735 = vst [vmem:[%s203 + $0x1c8] sm:$0xff] %v645
        %736 = vst [vmem:[%s203 + $0x1d0] sm:$0xff] %v650
        %737 = vst [vmem:[%s203 + $0x1d8] sm:$0xff] %v655
        %738 = vst [vmem:[%s203 + $0x1e0] sm:$0xff] %v660
        %739 = vst [vmem:[%s203 + $0x1e8] sm:$0xff] %v665
        %740 = vst [vmem:[%s203 + $0x1f0] sm:$0xff] %v670
        %741 = vst [vmem:[%s203 + $0x1f8] sm:$0xff] %v675
        %s742 = sand.u32 %s97, 1
        %s743 = scalar_lea.sflag [#allocation4], %s742
        %s744 = sand.u32 %s97, 1
        %s745 = smul.addr %s744, 512
        %s746 = scalar_lea.vmem [#allocation7], %s745
        // Predicated region
        $region41: #{tpu_custom_call.1} parent=31 // pred_check
          %p747 = pneg %p107
        $region42: #{tpu_custom_call.1} parent=31 // pred_check_branch
          %749 = sbr.rel (%p747) target = $region44
        $region43: #{tpu_custom_call.1} parent=31 // pred_region
          %s750 = smul.u32 64, %s21
          %s752 = ssub.s32 8192, 8192
          %753 = vsyncadd %s743, %s752
          %s754 = smul.addr %s750, 128
          %s755 = scalar_lea.hbm %s3, %s754
          %s756 = sshll.u32 %s746, 4
          %s757 = int_to_ptr.vmem [resolvable:$true] %s756
          %762 = dma.vmem_to_hbm [thread:$0]  %s757, 8192, %s755, %s743, 128, 128, 8
        $region44: #{tpu_custom_call.1} parent=31 // pred_fallthru
          _
      $region32: #{tpu_custom_call.1} parent=5 // pred_fallthru
        _
      %p763 = scmp.le.s32.totalorder 2, %s16
      // Predicated region
      $region45: #{tpu_custom_call.1} parent=5 // pred_check
        %p764 = pneg %p763
      $region46: #{tpu_custom_call.1} parent=5 // pred_check_branch
        %766 = sbr.rel (%p764) target = $region48
      $region47: #{tpu_custom_call.1} parent=5 // pred_region
        %s767 = ssub.s32 %s16, 2
        // Predicated region
        $region49: #{tpu_custom_call.1} parent=47 // pred_check
          %p768 = pneg %p113
        $region50: #{tpu_custom_call.1} parent=47 // pred_check_branch
          %770 = sbr.rel (%p768) target = $region52
        $region51: #{tpu_custom_call.1} parent=47 // pred_region
          %s771 = sand.u32 %s98, 1
          %s772 = scalar_lea.sflag [#allocation4], %s771
          %s773 = sand.u32 %s98, 1
          %s774 = smul.addr %s773, 512
          %s775 = scalar_lea.vmem [#allocation7], %s774
          %776 = dma.done %s772, 8192
        $region52: #{tpu_custom_call.1} parent=47 // pred_fallthru
          _
      $region48: #{tpu_custom_call.1} parent=5 // pred_fallthru
        _
    $region6: #{tpu_custom_call.1} parent=1 // loop_footer
      %s20 = sadd.s32 1, %s16
    $region7: #{tpu_custom_call.1} parent=1 // loop_footer_branch
      %15 = sbr.rel target = $region3
    $region8: #{tpu_custom_call.1} parent=1 // loop_exit
      _
    %777 = vsyncpa [#allocation3], 1
    %s778 = scalar_lea.sflag [#allocation3], 1
    %779 = vsyncpa %s778, 1
    %780 = vsyncpa [#allocation6], 1
    %781 = vsyncpa [#allocation4], 1
    %s782 = scalar_lea.sflag [#allocation4], 1
    %783 = vsyncpa %s782, 1

</llo_original>
